<compile_context>
chip_gen: v7x
topology: tpu7x:2x2x1
jax: 0.10.0
libtpu: 0.0.40
codegen_flags: <defaults>
</compile_context>

<pallas_src>
import jax
import jax.numpy as jnp
from jax.experimental import pallas as pl
from jax.experimental.pallas import tpu as pltpu


def _depth_attn_kernel(w_ref, x_ref, out_ref):
    # x block: (tn, C, td, HW); lanes = HW, sublanes = td.
    C = x_ref.shape[1]
    inv_hw = 1.0 / x_ref.shape[-1]

    # Spatial mean per (n, c, d): f32 accumulation inside the reduce only
    # (no full-block f32 temp kept live through the final scale).
    m = jnp.sum(x_ref[...], axis=-1, keepdims=True,
                dtype=jnp.float32) * inv_hw                  # (tn, C, td, 1)

    # Channel mix = 1x1x1 conv (C -> 1, no bias): scalar-broadcast MAC loop
    # over SMEM weights (stays on the VPU; MXU left free).
    logit = w_ref[0] * m[:, 0]                               # (tn, td, 1)
    for c in range(1, C):
        logit = logit + w_ref[c] * m[:, c]
    # TODO(synk): for very large C (>=64) switch to a vectorized channel
    # reduce over a VMEM-resident weight column instead of the scalar loop.

    a = jax.nn.sigmoid(logit)                                # (tn, td, 1), f32

    # Scale in the native dtype; broadcast over channels (dim 1) and lanes.
    out_ref[...] = x_ref[...] * a.astype(out_ref.dtype)[:, None, :, :]


def _pick_td(D, per_d_bytes, sub, block_max):
    """Depth tile: prefer full D (contiguous per-n DMA), else the largest
    sublane-aligned divisor of D whose block fits the byte budget."""
    if D * per_d_bytes <= block_max:
        return D
    aligned = [td for td in range(sub, D, sub) if D % td == 0]
    fitting = [td for td in aligned if td * per_d_bytes <= block_max]
    if fitting:
        return max(fitting)
    if aligned:
        return min(aligned)
    return D  # full extent is always a legal block dim


def _make_x_spec(block_shape, index_map, block_bytes, num_steps):
    """Triple-buffer only tiny blocks (per-step DMA issue latency dominates);
    keep default double buffering for MiB-sized blocks (VMEM matters on v7x)."""
    if block_bytes < (512 << 10) and num_steps >= 3 and hasattr(pl, "Buffered"):
        try:
            return pl.BlockSpec(block_shape, index_map,
                                pipeline_mode=pl.Buffered(3))
        except TypeError:
            pass  # older API without pipeline_mode; fall back to default
    return pl.BlockSpec(block_shape, index_map)


def depth_attention_3d(x, w):
    """x: (N, C, D, H, W); w: (C,) = Conv3d(C, 1, 1, bias=False) weight."""
    N, C, D, H, W = x.shape
    HW = H * W
    x_r = x.reshape(N, C, D, HW)                 # metadata-only reshape

    item = jnp.dtype(x.dtype).itemsize
    # Min sublane multiple for the second-to-last block dim when td < D
    # (sub-32-bit dtypes pack along sublanes).
    sub = {4: 8, 2: 16, 1: 32}.get(item, 8)

    BLOCK_TARGET = 2 << 20                       # aim for ~2 MiB blocks
    BLOCK_MAX = 4 << 20                          # cap: ~5x this stays < 24 MiB (v7x-safe)

    per_d_bytes = C * HW * item
    td = _pick_td(D, per_d_bytes, sub, BLOCK_MAX)

    # If the per-n block is still small, grow along N -- but keep the grid at
    # >= 2 steps so v7x's two TensorCores both get work.
    per_n_bytes = C * td * HW * item
    tn = 1
    if td == D and N > 1 and per_n_bytes < BLOCK_TARGET:
        max_tn = max(1, N // 2)
        for cand in range(1, max_tn + 1):
            if N % cand == 0 and cand * per_n_bytes <= BLOCK_MAX:
                tn = cand

    block_shape = (tn, C, td, HW)
    block_bytes = tn * per_n_bytes if td == D else tn * C * td * HW * item
    grid = (N // tn, D // td)
    num_steps = grid[0] * grid[1]

    index_map = lambda n, dt: (n, 0, dt, 0)
    x_spec = _make_x_spec(block_shape, index_map, block_bytes, num_steps)

    # TODO(synk): if production H*W is not a multiple of 128 (e.g. 8x8), fold
    # D into the lane axis and broadcast a[d] across its HW lanes to keep
    # stores unmasked instead of relying on masked partial stores.

    cost = pl.CostEstimate(
        flops=2 * x_r.size,                      # mean + scale, roughly
        transcendentals=N * D,                   # one sigmoid per (n, d)
        bytes_accessed=2 * x_r.size * item + C * jnp.dtype(w.dtype).itemsize,
    )

    out = pl.pallas_call(
        _depth_attn_kernel,
        out_shape=jax.ShapeDtypeStruct((N, C, D, HW), x.dtype),
        grid_spec=pltpu.PrefetchScalarGridSpec(
            num_scalar_prefetch=0,
            grid=grid,
            in_specs=[
                pl.BlockSpec(memory_space=pltpu.MemorySpace.SMEM),   # w (C,)
                x_spec,
            ],
            out_specs=pl.BlockSpec(block_shape, index_map),
        ),
        compiler_params=pltpu.CompilerParams(
            dimension_semantics=("parallel", "parallel"),
            vmem_limit_bytes=28 * 1024 * 1024,   # explicit; safe on v5e/v6e/v7x
        ),
        cost_estimate=cost,
    )(w, x_r)
    return out.reshape(N, C, D, H, W)


def reference(x, w):
    """Pure-JAX reference matching the PyTorch forward."""
    avg = jnp.mean(x, axis=(-1, -2), keepdims=True)            # (N, C, D, 1, 1)
    logit = jnp.einsum('ncdhw,c->ndhw', avg, w)[:, None]       # (N, 1, D, 1, 1)
    return jax.nn.sigmoid(logit) * x


if __name__ == "__main__":
    N, C, D, H, W = 2, 4, 8, 16, 16
    k1, k2 = jax.random.split(jax.random.PRNGKey(0))

    x = jax.random.normal(k1, (N, C, D, H, W), jnp.float32)
    # Conv3d(C, 1, kernel_size=1, bias=False) weight: (1, C, 1, 1, 1) -> (C,)
    w = 0.5 * jax.random.normal(k2, (C,), jnp.float32)

    out = depth_attention_3d(x, w)
    out = jax.block_until_ready(out)

    ref = reference(x, w)
    err = float(jnp.max(jnp.abs(out - ref)))
    assert out.shape == (N, C, D, H, W), out.shape
    assert err < 1e-5, f"max abs error vs reference: {err}"

    print("KERNEL_OK")
</pallas_src>

<mosaic_0001>
module attributes {stable_mosaic.version = 11 : i64} {
  func.func @_depth_attn_kernel(%arg0: i32, %arg1: i32, %arg2: memref<4xf32, #tpu.memory_space<smem>>, %arg3: memref<1x4x8x256xf32, #tpu.memory_space<vmem>>, %arg4: memref<1x4x8x256xf32, #tpu.memory_space<vmem>>) attributes {dimension_semantics = [#tpu.dimension_semantics<parallel>, #tpu.dimension_semantics<parallel>], iteration_bounds = array<i64: 2, 1>, scalar_prefetch = 0 : i64, scratch_operands = 0 : i64, tpu.core_type = #tpu.core_type<tc>, window_params = [{transform_indices = @transform_0, window_bounds = array<i64: 4>}, {transform_indices = @transform_1, window_bounds = array<i64: 1, 4, 8, 256>}, {transform_indices = @transform_2, window_bounds = array<i64: 1, 4, 8, 256>}]} {
    %c0 = arith.constant 0 : index
    %c0_0 = arith.constant 0 : index
    %c0_1 = arith.constant 0 : index
    %c0_2 = arith.constant 0 : index
    %0 = vector.load %arg3[%c0, %c0_0, %c0_1, %c0_2] : memref<1x4x8x256xf32, #tpu.memory_space<vmem>>, vector<1x4x8x256xf32>
    %cst = arith.constant dense<0.000000e+00> : vector<1x4x8xf32>
    %1 = vector.multi_reduction <add>, %0, %cst [3] : vector<1x4x8x256xf32> to vector<1x4x8xf32>
    %2 = vector.shape_cast %1 : vector<1x4x8xf32> to vector<1x4x8x1xf32>
    %cst_3 = arith.constant 3.906250e-03 : f32
    %3 = vector.broadcast %cst_3 : f32 to vector<1x4x8x1xf32>
    %4 = arith.mulf %2, %3 : vector<1x4x8x1xf32>
    %c0_4 = arith.constant 0 : index
    %5 = memref.load %arg2[%c0_4] : memref<4xf32, #tpu.memory_space<smem>>
    %6 = vector.extract_strided_slice %4 {offsets = [0, 0, 0, 0], sizes = [1, 1, 8, 1], strides = [1, 1, 1, 1]} : vector<1x4x8x1xf32> to vector<1x1x8x1xf32>
    %7 = vector.shape_cast %6 : vector<1x1x8x1xf32> to vector<1x8x1xf32>
    %8 = vector.broadcast %5 : f32 to vector<1x8x1xf32>
    %9 = arith.mulf %8, %7 : vector<1x8x1xf32>
    %c1 = arith.constant 1 : index
    %10 = memref.load %arg2[%c1] : memref<4xf32, #tpu.memory_space<smem>>
    %11 = vector.extract_strided_slice %4 {offsets = [0, 1, 0, 0], sizes = [1, 1, 8, 1], strides = [1, 1, 1, 1]} : vector<1x4x8x1xf32> to vector<1x1x8x1xf32>
    %12 = vector.shape_cast %11 : vector<1x1x8x1xf32> to vector<1x8x1xf32>
    %13 = vector.broadcast %10 : f32 to vector<1x8x1xf32>
    %14 = arith.mulf %13, %12 : vector<1x8x1xf32>
    %15 = arith.addf %9, %14 : vector<1x8x1xf32>
    %c2 = arith.constant 2 : index
    %16 = memref.load %arg2[%c2] : memref<4xf32, #tpu.memory_space<smem>>
    %17 = vector.extract_strided_slice %4 {offsets = [0, 2, 0, 0], sizes = [1, 1, 8, 1], strides = [1, 1, 1, 1]} : vector<1x4x8x1xf32> to vector<1x1x8x1xf32>
    %18 = vector.shape_cast %17 : vector<1x1x8x1xf32> to vector<1x8x1xf32>
    %19 = vector.broadcast %16 : f32 to vector<1x8x1xf32>
    %20 = arith.mulf %19, %18 : vector<1x8x1xf32>
    %21 = arith.addf %15, %20 : vector<1x8x1xf32>
    %c3 = arith.constant 3 : index
    %22 = memref.load %arg2[%c3] : memref<4xf32, #tpu.memory_space<smem>>
    %23 = vector.extract_strided_slice %4 {offsets = [0, 3, 0, 0], sizes = [1, 1, 8, 1], strides = [1, 1, 1, 1]} : vector<1x4x8x1xf32> to vector<1x1x8x1xf32>
    %24 = vector.shape_cast %23 : vector<1x1x8x1xf32> to vector<1x8x1xf32>
    %25 = vector.broadcast %22 : f32 to vector<1x8x1xf32>
    %26 = arith.mulf %25, %24 : vector<1x8x1xf32>
    %27 = arith.addf %21, %26 : vector<1x8x1xf32>
    %28 = arith.negf %27 : vector<1x8x1xf32>
    %29 = math.exp %28 : vector<1x8x1xf32>
    %cst_5 = arith.constant 1.000000e+00 : f32
    %30 = vector.broadcast %cst_5 : f32 to vector<1x8x1xf32>
    %31 = arith.addf %30, %29 : vector<1x8x1xf32>
    %32 = arith.divf %30, %31 : vector<1x8x1xf32>
    %c0_6 = arith.constant 0 : index
    %c0_7 = arith.constant 0 : index
    %c0_8 = arith.constant 0 : index
    %c0_9 = arith.constant 0 : index
    %33 = vector.load %arg3[%c0_6, %c0_7, %c0_8, %c0_9] : memref<1x4x8x256xf32, #tpu.memory_space<vmem>>, vector<1x4x8x256xf32>
    %34 = vector.shape_cast %32 : vector<1x8x1xf32> to vector<1x1x8x1xf32>
    %35 = vector.broadcast %34 : vector<1x1x8x1xf32> to vector<1x4x8x256xf32>
    %36 = arith.mulf %33, %35 : vector<1x4x8x256xf32>
    %c0_10 = arith.constant 0 : index
    %c0_11 = arith.constant 0 : index
    %c0_12 = arith.constant 0 : index
    %c0_13 = arith.constant 0 : index
    %37 = vector.load %arg4[%c0_10, %c0_11, %c0_12, %c0_13] : memref<1x4x8x256xf32, #tpu.memory_space<vmem>>, vector<1x4x8x256xf32>
    tpu.vector_store %arg4[%c0_10, %c0_11, %c0_12, %c0_13], %36 {strides = array<i32>} : memref<1x4x8x256xf32, #tpu.memory_space<vmem>>, vector<1x4x8x256xf32>,
    return
  }
  func.func @transform_0(%arg0: i32, %arg1: i32) -> i32 {
    %c0_i32 = arith.constant 0 : i32
    %c0_i32_0 = arith.constant 0 : i32
    return %c0_i32 : i32
  }
  func.func @transform_1(%arg0: i32, %arg1: i32) -> (i32, i32, i32, i32) {
    %c0_i32 = arith.constant 0 : i32
    %c0_i32_0 = arith.constant 0 : i32
    %c0_i32_1 = arith.constant 0 : i32
    return %arg0, %c0_i32, %arg1, %c0_i32_0 : i32, i32, i32, i32
  }
  func.func @transform_2(%arg0: i32, %arg1: i32) -> (i32, i32, i32, i32) {
    %c0_i32 = arith.constant 0 : i32
    %c0_i32_0 = arith.constant 0 : i32
    %c0_i32_1 = arith.constant 0 : i32
    return %arg0, %c0_i32, %arg1, %c0_i32_0 : i32, i32, i32, i32
  }
}

</mosaic_0001>

<llo_original>
// kernel: tpu_custom_call.1
$region0: #{tpu_custom_call.1}
  #allocation0 [shape = 'u32[]', space=smem, size = 0x4, offset = 0x4, fixed_abs, tag = 'smem constant byte address 0x4 - core index']
  #allocation1 [shape = 'u32[144,128]{1,0:T(1,128)}', space=vmem, size = 0x12000, scoped, tag = 'internal scratch']
  %s0 = inlined_call_operand.hbm [shape: f32[4], index: 0, kind: input, shape index: {}]
  %s1 = inlined_call_operand.hbm [shape: f32[2,4,8,256], index: 1, kind: input, shape index: {}]
  %s2 = inlined_call_operand.hbm [shape: f32[2,4,8,256], index: 2, kind: output, shape index: {}]
  %s3 = sld [smem:[#allocation0]]
  $region49: #{tpu_custom_call.1} parent=0
    _
  %s5 = ssub.s32 1, %s3
  %s6 = scalar_select 0, %s5, %s3
  $region1: #{tpu_custom_call.1} parent=0
    #allocation2 [shape = 'u8[512]{0}', space=smem, size = 0x200, scoped, tag = 'input window, operand 0, single buffered']
    #allocation3 [shape = 's32[2]{0}', space=sflag, size = 0x8, scoped, tag = 'scoped memory for tpu_custom_call.1']
    #allocation4 [shape = 's32[2]{0}', space=sflag, size = 0x8, scoped, tag = 'scoped memory for tpu_custom_call.1']
    #allocation5 [shape = 's32[2]{0}', space=sflag, size = 0x8, scoped, tag = 'scoped memory for tpu_custom_call.1']
    #allocation6 [shape = 'u8[65536]{0}', space=vmem, size = 0x10000, scoped, tag = 'input window, operand 1']
    #allocation7 [shape = 'u8[65536]{0}', space=vmem, size = 0x10000, scoped, tag = 'output window, operand 0']
    %7 = vsyncpa [#allocation5], 0
    %8 = vsyncpa [#allocation3], 0
    %s9 = scalar_lea.sflag [#allocation3], 1
    %10 = vsyncpa %s9, 0
    %11 = vsyncpa [#allocation4], 0
    %s12 = scalar_lea.sflag [#allocation4], 1
    %13 = vsyncpa %s12, 0
    loop: start=0, step=1, limit=4
    $region2: #{tpu_custom_call.1} parent=1 // loop_pre_header
      _
    $region3: #{tpu_custom_call.1} parent=1 // loop_header
      %s15 = sphi 0, %s19
      %p16 = scmp.ge.s32.totalorder %s15, 4
      %s22 = sphi 0, %s34
      %s23 = sphi 0, %s30
      %s24 = sphi 0, %s22
      %s25 = sphi 0, %s23
      %s26 = sphi 0, %s24
      %s27 = sphi 0, %s25
      %s35 = sphi 0, %s35
      %s37 = sphi 0, %s35
      %s38 = sphi 0, %s37
      %s52 = sphi 0, %s38
      %s60 = sphi 0, %s62
      %s63 = sphi 0, %s60
      %s64 = sphi 0, %s63
      %s80 = sphi 0, %s64
      %s88 = sphi 0, %s90
      %s91 = sphi 0, %s88
      %s92 = sphi 0, %s91
      %s108 = sphi 0, %s92
    $region4: #{tpu_custom_call.1} parent=1 // loop_header_branch
      %18 = sbr.rel (%p16) target = $region8
    $region5: #{tpu_custom_call.1} parent=1 // loop_body
      %s20 = ssub.s32 %s15, 1
      %s21 = ssub.s32 %s15, 2
      %s28 = sadd.s32 1, %s23
      %p29 = scmp.ge.s32.totalorder %s28, 1
      %s30 = scalar_select %p29, 0, %s28
      %s31 = sadd.s32 1, %s22
      %s32 = scalar_select %p29, %s31, %s22
      %p33 = scmp.ge.s32.totalorder %s32, 2
      %s34 = scalar_select %p33, 0, %s32
      %s36 = sadd.s32 %s35, 1
      %p39 = scmp.eq.s32.totalorder %s15, 1
      %p40 = scmp.ne.s32.totalorder %s35, %s37
      %p41 = scmp.eq.s32.totalorder %s15, 0
      %p42 = por %p40, %p41
      %p43 = scmp.ne.s32.totalorder %s35, %s37
      %p44 = scmp.eq.s32.totalorder %s20, 1
      %p45 = por %p43, %p44
      %p46 = scmp.ne.s32.totalorder %s37, %s38
      %p47 = scmp.eq.s32.totalorder %s20, 0
      %p48 = por %p46, %p47
      %p49 = scmp.ne.s32.totalorder %s37, %s38
      %p50 = scmp.eq.s32.totalorder %s21, 1
      %p51 = por %p49, %p50
      %p53 = scmp.ne.s32.totalorder %s38, %s52
      %p54 = scmp.eq.s32.totalorder %s21, 0
      %p55 = por %p53, %p54
      %s56 = ssub.s32 %s22, %s34
      %s57 = ssub.s32 %s23, %s30
      %s58 = sor.u32 %s56, %s57
      %p59 = scmp.eq.s32.totalorder %s58, 0
      %s61 = sadd.s32 %s60, 1
      %s62 = scalar_select %p59, %s60, %s61
      %p65 = pneg %p59
      %p66 = scmp.eq.s32.totalorder %s15, 1
      %p67 = por %p65, %p66
      %p68 = scmp.ne.s32.totalorder %s60, %s63
      %p69 = scmp.eq.s32.totalorder %s15, 0
      %p70 = por %p68, %p69
      %p71 = scmp.ne.s32.totalorder %s60, %s63
      %p72 = scmp.eq.s32.totalorder %s20, 1
      %p73 = por %p71, %p72
      %p74 = scmp.ne.s32.totalorder %s63, %s64
      %p75 = scmp.eq.s32.totalorder %s20, 0
      %p76 = por %p74, %p75
      %p77 = scmp.ne.s32.totalorder %s63, %s64
      %p78 = scmp.eq.s32.totalorder %s21, 1
      %p79 = por %p77, %p78
      %p81 = scmp.ne.s32.totalorder %s64, %s80
      %p82 = scmp.eq.s32.totalorder %s21, 0
      %p83 = por %p81, %p82
      %s84 = ssub.s32 %s22, %s34
      %s85 = ssub.s32 %s23, %s30
      %s86 = sor.u32 %s84, %s85
      %p87 = scmp.eq.s32.totalorder %s86, 0
      %s89 = sadd.s32 %s88, 1
      %s90 = scalar_select %p87, %s88, %s89
      %p93 = pneg %p87
      %p94 = scmp.eq.s32.totalorder %s15, 1
      %p95 = por %p93, %p94
      %p96 = scmp.ne.s32.totalorder %s88, %s91
      %p97 = scmp.eq.s32.totalorder %s15, 0
      %p98 = por %p96, %p97
      %p99 = scmp.ne.s32.totalorder %s88, %s91
      %p100 = scmp.eq.s32.totalorder %s20, 1
      %p101 = por %p99, %p100
      %p102 = scmp.ne.s32.totalorder %s91, %s92
      %p103 = scmp.eq.s32.totalorder %s20, 0
      %p104 = por %p102, %p103
      %p105 = scmp.ne.s32.totalorder %s91, %s92
      %p106 = scmp.eq.s32.totalorder %s21, 1
      %p107 = por %p105, %p106
      %p109 = scmp.ne.s32.totalorder %s92, %s108
      %p110 = scmp.eq.s32.totalorder %s21, 0
      %p111 = por %p109, %p110
      %p112 = scmp.le.s32.totalorder 1, %s15
      %p113 = scmp.lt.s32.totalorder %s15, 3
      %p114 = pnand %p112, %p113
      %p115 = pneg %p114
      // Predicated region
      $region9: #{tpu_custom_call.1} parent=5 // pred_check
        _
      $region10: #{tpu_custom_call.1} parent=5 // pred_check_branch
        %117 = sbr.rel (%p114) target = $region12
      $region11: #{tpu_custom_call.1} parent=5 // pred_region
        %s118 = ssub.s32 %s15, 1
        // Predicated region
        $region13: #{tpu_custom_call.1} parent=11 // pred_check
          %p119 = pneg %p48
        $region14: #{tpu_custom_call.1} parent=11 // pred_check_branch
          %121 = sbr.rel (%p119) target = $region16
        $region15: #{tpu_custom_call.1} parent=11 // pred_region
          %s123 = ssub.s32 16, 16
          %124 = vsyncadd [#allocation5], %s123
          %127 = dma.hbm_to_smem %s0, 16, [#allocation2], [#allocation5]
        $region16: #{tpu_custom_call.1} parent=11 // pred_fallthru
          _
      $region12: #{tpu_custom_call.1} parent=5 // pred_fallthru
        _
      %p128 = scmp.lt.s32.totalorder %s15, 2
      // Predicated region
      $region17: #{tpu_custom_call.1} parent=5 // pred_check
        %p129 = pneg %p128
      $region18: #{tpu_custom_call.1} parent=5 // pred_check_branch
        %131 = sbr.rel (%p129) target = $region20
      $region19: #{tpu_custom_call.1} parent=5 // pred_region
        // Predicated region
        $region21: #{tpu_custom_call.1} parent=19 // pred_check
          %p132 = pneg %p70
        $region22: #{tpu_custom_call.1} parent=19 // pred_check_branch
          %134 = sbr.rel (%p132) target = $region24
        $region23: #{tpu_custom_call.1} parent=19 // pred_region
          %s135 = sand.u32 %s60, 1
          %s136 = scalar_lea.sflag [#allocation3], %s135
          %s137 = sand.u32 %s60, 1
          %s138 = smul.addr %s137, 64
          %s139 = scalar_lea.vmem [#allocation6], %s138
          %s141 = ssub.s32 1024, 1024
          %142 = vsyncadd %s136, %s141
          %s143 = smul.addr %s23, 2
          %s144 = smul.addr %s22, 8
          %s145 = sadd.s32 %s143, %s144
          %s146 = smul.addr %s145, 128
          %s147 = scalar_lea.hbm %s1, %s146
          %s148 = sshll.u32 %s139, 4
          %s149 = int_to_ptr.vmem [resolvable:$true] %s148
          %154 = dma.hbm_to_vmem [thread:$0]  %s147, 1024, %s149, %s136, 256, 256, 16
        $region24: #{tpu_custom_call.1} parent=19 // pred_fallthru
          _
      $region20: #{tpu_custom_call.1} parent=5 // pred_fallthru
        _
      %p155 = scmp.le.s32.totalorder 1, %s15
      %p156 = scmp.lt.s32.totalorder %s15, 3
      %p157 = pnand %p155, %p156
      %p158 = pneg %p157
      // Predicated region
      $region25: #{tpu_custom_call.1} parent=5 // pred_check
        _
      $region26: #{tpu_custom_call.1} parent=5 // pred_check_branch
        %160 = sbr.rel (%p157) target = $region28
      $region27: #{tpu_custom_call.1} parent=5 // pred_region
        %s161 = ssub.s32 %s15, 1
        // Predicated region
        $region29: #{tpu_custom_call.1} parent=27 // pred_check
          %p162 = pneg %p48
        $region30: #{tpu_custom_call.1} parent=27 // pred_check_branch
          %164 = sbr.rel (%p162) target = $region32
        $region31: #{tpu_custom_call.1} parent=27 // pred_region
          %165 = dma.done [#allocation5], 16
        $region32: #{tpu_custom_call.1} parent=27 // pred_fallthru
          _
        %s166 = sand.u32 %s63, 1
        %s167 = scalar_lea.sflag [#allocation3], %s166
        %s168 = sand.u32 %s63, 1
        %s169 = smul.addr %s168, 64
        %s170 = scalar_lea.vmem [#allocation6], %s169
        // Predicated region
        $region33: #{tpu_custom_call.1} parent=27 // pred_check
          %p171 = pneg %p76
        $region34: #{tpu_custom_call.1} parent=27 // pred_check_branch
          %173 = sbr.rel (%p171) target = $region36
        $region35: #{tpu_custom_call.1} parent=27 // pred_region
          %174 = dma.done %s167, 1024
        $region36: #{tpu_custom_call.1} parent=27 // pred_fallthru
          _
        %175 = sfence
        %p176 = pneg %p48
        %p177 = pneg %p45
        %s178 = sand.u32 %s63, 1
        %s179 = scalar_lea.sflag [#allocation3], %s178
        %s180 = sand.u32 %s63, 1
        %s181 = smul.addr %s180, 64
        %s182 = scalar_lea.vmem [#allocation6], %s181
        %p183 = pneg %p76
        %p184 = pneg %p73
        %p185 = pneg %p104
        %p186 = pneg %p101
        %s187 = sand.u32 %s91, 1
        %s188 = scalar_lea.sflag [#allocation4], %s187
        %s189 = sand.u32 %s91, 1
        %s190 = smul.addr %s189, 64
        %s191 = scalar_lea.vmem [#allocation7], %s190
        %v192 = vld [vmem:[%s170] sm:$0xff]
        %v193 = vld [vmem:[%s170 + $0x8] sm:$0xff]
        %v194 = vld [vmem:[%s170 + $0x10] sm:$0xff]
        %v195 = vld [vmem:[%s170 + $0x18] sm:$0xff]
        %v196 = vld [vmem:[%s170 + $0x20] sm:$0xff]
        %v197 = vld [vmem:[%s170 + $0x28] sm:$0xff]
        %v198 = vld [vmem:[%s170 + $0x30] sm:$0xff]
        %v199 = vld [vmem:[%s170 + $0x38] sm:$0xff]
        %v200 = vadd.f32 %v192, %v193
        %201 = vadd.xlane.f32.xlu0 %v200
        %v202 = vpop.xlane.xlu0 %201
        %v203 = vadd.f32 %v194, %v195
        %204 = vadd.xlane.f32.xlu0 %v203
        %v205 = vpop.xlane.xlu0 %204
        %v206 = vadd.f32 %v196, %v197
        %207 = vadd.xlane.f32.xlu0 %v206
        %v208 = vpop.xlane.xlu0 %207
        %v209 = vadd.f32 %v198, %v199
        %210 = vadd.xlane.f32.xlu0 %v209
        %v211 = vpop.xlane.xlu0 %210
        %v212 = vmul.f32 %v202, 0.00390625
        %v213 = vmul.f32 %v205, 0.00390625
        %v214 = vmul.f32 %v208, 0.00390625
        %v215 = vmul.f32 %v211, 0.00390625
        %s216 = sld [smem:[#allocation2]]
        %v217 = vstv %s216
        %v218 = vmul.f32 %v217, %v212
        %s219 = sld [smem:[#allocation2 + $0x1]]
        %v220 = vstv %s219
        %v221 = vmul.f32 %v220, %v213
        %v222 = vadd.f32 %v218, %v221
        %s223 = sld [smem:[#allocation2 + $0x2]]
        %v224 = vstv %s223
        %v225 = vmul.f32 %v224, %v214
        %v226 = vadd.f32 %v222, %v225
        %s227 = sld [smem:[#allocation2 + $0x3]]
        %v228 = vstv %s227
        %v229 = vmul.f32 %v228, %v215
        %v230 = vadd.f32 %v226, %v229
        %v231 = vxor.u32 %v230, 2147483648
        %v232 = vmul.f32 %v231, 1.442695
        %v233 = vpow.pop %v232
        %v234 = vadd.f32 %v233, 1.0
        %v235 = vrcp.pop %v234
        %v236 = vmul.f32 1.0, %v235
        %v237 = vmul.f32 %v192, %v236
        %v238 = vmul.f32 %v193, %v236
        %v239 = vmul.f32 %v194, %v236
        %v240 = vmul.f32 %v195, %v236
        %v241 = vmul.f32 %v196, %v236
        %v242 = vmul.f32 %v197, %v236
        %v243 = vmul.f32 %v198, %v236
        %v244 = vmul.f32 %v199, %v236
        %245 = vst [vmem:[%s191] sm:$0xff] %v237
        %246 = vst [vmem:[%s191 + $0x8] sm:$0xff] %v238
        %247 = vst [vmem:[%s191 + $0x10] sm:$0xff] %v239
        %248 = vst [vmem:[%s191 + $0x18] sm:$0xff] %v240
        %249 = vst [vmem:[%s191 + $0x20] sm:$0xff] %v241
        %250 = vst [vmem:[%s191 + $0x28] sm:$0xff] %v242
        %251 = vst [vmem:[%s191 + $0x30] sm:$0xff] %v243
        %252 = vst [vmem:[%s191 + $0x38] sm:$0xff] %v244
        %s253 = sand.u32 %s91, 1
        %s254 = scalar_lea.sflag [#allocation4], %s253
        %s255 = sand.u32 %s91, 1
        %s256 = smul.addr %s255, 64
        %s257 = scalar_lea.vmem [#allocation7], %s256
        // Predicated region
        $region37: #{tpu_custom_call.1} parent=27 // pred_check
          %p258 = pneg %p101
        $region38: #{tpu_custom_call.1} parent=27 // pred_check_branch
          %260 = sbr.rel (%p258) target = $region40
        $region39: #{tpu_custom_call.1} parent=27 // pred_region
          %s262 = ssub.s32 1024, 1024
          %263 = vsyncadd %s254, %s262
          %s264 = smul.addr %s25, 2
          %s265 = smul.addr %s24, 8
          %s266 = sadd.s32 %s264, %s265
          %s267 = smul.addr %s266, 128
          %s268 = scalar_lea.hbm %s2, %s267
          %s269 = sshll.u32 %s257, 4
          %s270 = int_to_ptr.vmem [resolvable:$true] %s269
          %275 = dma.vmem_to_hbm [thread:$0]  %s270, 1024, %s268, %s254, 256, 256, 16
        $region40: #{tpu_custom_call.1} parent=27 // pred_fallthru
          _
      $region28: #{tpu_custom_call.1} parent=5 // pred_fallthru
        _
      %p276 = scmp.le.s32.totalorder 2, %s15
      // Predicated region
      $region41: #{tpu_custom_call.1} parent=5 // pred_check
        %p277 = pneg %p276
      $region42: #{tpu_custom_call.1} parent=5 // pred_check_branch
        %279 = sbr.rel (%p277) target = $region44
      $region43: #{tpu_custom_call.1} parent=5 // pred_region
        %s280 = ssub.s32 %s15, 2
        // Predicated region
        $region45: #{tpu_custom_call.1} parent=43 // pred_check
          %p281 = pneg %p107
        $region46: #{tpu_custom_call.1} parent=43 // pred_check_branch
          %283 = sbr.rel (%p281) target = $region48
        $region47: #{tpu_custom_call.1} parent=43 // pred_region
          %s284 = sand.u32 %s92, 1
          %s285 = scalar_lea.sflag [#allocation4], %s284
          %s286 = sand.u32 %s92, 1
          %s287 = smul.addr %s286, 64
          %s288 = scalar_lea.vmem [#allocation7], %s287
          %289 = dma.done %s285, 1024
        $region48: #{tpu_custom_call.1} parent=43 // pred_fallthru
          _
      $region44: #{tpu_custom_call.1} parent=5 // pred_fallthru
        _
    $region6: #{tpu_custom_call.1} parent=1 // loop_footer
      %s19 = sadd.s32 1, %s15
    $region7: #{tpu_custom_call.1} parent=1 // loop_footer_branch
      %14 = sbr.rel target = $region3
    $region8: #{tpu_custom_call.1} parent=1 // loop_exit
      _
    %290 = vsyncpa [#allocation3], 1
    %s291 = scalar_lea.sflag [#allocation3], 1
    %292 = vsyncpa %s291, 1
    %293 = vsyncpa [#allocation4], 1
    %s294 = scalar_lea.sflag [#allocation4], 1
    %295 = vsyncpa %s294, 1
    %296 = vsyncpa [#allocation5], 1
    %s297 = scalar_lea.sflag [#allocation5], 1
    %298 = vsyncpa %s297, 1

</llo_original>
